<compile_context>
chip_gen: v5e
topology: v5e:2x2
jax: 0.10.0
libtpu: 0.0.40
codegen_flags: <defaults>
</compile_context>

<pallas_src>
import jax
import jax.numpy as jnp
import numpy as np
from jax.experimental import pallas as pl
from jax.experimental.pallas import tpu as pltpu


# -----------------------------------------------------------------------------
# Primary: pure identity — no custom call, no fusion barrier, no dispatch cost.
# -----------------------------------------------------------------------------
def tap_forward(x: jax.Array, fn=None) -> jax.Array:
    """Tap.forward: call the side-effect hook (if any) and return x unchanged.

    TODO(synk): under jax.jit an arbitrary Python side-effect hook would need
    jax.debug.callback / io_callback; in eager mode a direct call below matches
    PyTorch Tap semantics exactly.  There is no in-kernel Pallas equivalent.
    """
    if fn is not None:
        fn(x)
    return x


# -----------------------------------------------------------------------------
# Optional: zero-copy aliased passthrough as a Pallas custom call
# (only if an actual kernel is required for API reasons).
# -----------------------------------------------------------------------------
def _tap_alias_kernel(x_hbm_ref, o_hbm_ref, flag_ref):
    # x_hbm_ref and o_hbm_ref alias the same HBM buffer (input_output_aliases),
    # so no data movement is required.  Write one scalar to SMEM scratch so the
    # kernel body is non-empty (known-good lowering on all generations).
    del x_hbm_ref, o_hbm_ref
    flag_ref[0] = jnp.int32(1)


def tap_forward_pallas(x: jax.Array) -> jax.Array:
    """Identity passthrough as a zero-copy aliased pallas_call.

    NOTE: for true zero-copy under jit, the caller must donate x's buffer
    (jax.jit(..., donate_argnums=...)); otherwise XLA inserts a defensive
    HBM->HBM copy before the custom call.
    """
    return pl.pallas_call(
        _tap_alias_kernel,
        out_shape=jax.ShapeDtypeStruct(x.shape, x.dtype),
        in_specs=[pl.BlockSpec(memory_space=pl.ANY)],
        out_specs=pl.BlockSpec(memory_space=pl.ANY),
        scratch_shapes=[pltpu.SMEM((1,), jnp.int32)],
        input_output_aliases={0: 0},
    )(x)


# -----------------------------------------------------------------------------
# Explicit materialized copy: one HBM->HBM DMA (no VMEM staging, no grid).
# -----------------------------------------------------------------------------
def _tap_dma_copy_kernel(x_hbm_ref, o_hbm_ref, sem):
    cp = pltpu.make_async_copy(x_hbm_ref, o_hbm_ref, sem)
    cp.start()
    cp.wait()


def tap_forward_copy(x: jax.Array) -> jax.Array:
    """Identity that returns a fresh buffer, via a single full-bandwidth DMA.

    Works for any shape/dtype: the bytes never touch VMEM, so there are no
    (8,128) tiling constraints, no per-grid-step overhead, and no VMEM budget
    concerns on v7x's smaller (64 MiB) VMEM.
    """
    return pl.pallas_call(
        _tap_dma_copy_kernel,
        out_shape=jax.ShapeDtypeStruct(x.shape, x.dtype),
        in_specs=[pl.BlockSpec(memory_space=pl.ANY)],
        out_specs=pl.BlockSpec(memory_space=pl.ANY),
        scratch_shapes=[pltpu.SemaphoreType.DMA(())],
    )(x)


if __name__ == "__main__":
    key = jax.random.PRNGKey(0)
    # Small conv-block-style input: NCHW with N=2, C=4, H=W=16.
    x = jax.random.normal(key, (2, 4, 16, 16), dtype=jnp.float32)
    x_host = np.asarray(x)  # snapshot: the aliased path may reuse x's buffer

    # Explicit-copy variant: single HBM->HBM DMA, fresh output buffer.
    y_copy = jax.block_until_ready(tap_forward_copy(x))
    assert y_copy.shape == x.shape and y_copy.dtype == x.dtype
    assert np.array_equal(np.asarray(y_copy), x_host)

    # Primary path: pure identity + eager side-effect hook (no custom call).
    tapped = []
    y = tap_forward(x, fn=lambda t: tapped.append(t.shape))
    assert y.shape == x_host.shape and y.dtype == x_host.dtype
    assert np.array_equal(np.asarray(y), x_host)
    assert tapped == [x.shape]

    # Aliased pallas passthrough (run last: it may alias x's buffer).
    y_alias = jax.block_until_ready(tap_forward_pallas(x))
    assert y_alias.shape == x_host.shape and y_alias.dtype == x_host.dtype
    assert np.array_equal(np.asarray(y_alias), x_host)

    print("KERNEL_OK")
</pallas_src>

<mosaic_0001>
module attributes {stable_mosaic.version = 11 : i64} {
  func.func @_tap_dma_copy_kernel(%arg0: memref<2x4x16x16xf32, #tpu.memory_space<any>>, %arg1: memref<2x4x16x16xf32, #tpu.memory_space<any>>, %arg2: memref<!tpu.dma_semaphore, #tpu.memory_space<semaphore_mem>>) attributes {dimension_semantics = [], scalar_prefetch = 0 : i64, scratch_operands = 1 : i64, tpu.core_type = #tpu.core_type<tc>} {
    tpu.enqueue_dma source(%arg0 : memref<2x4x16x16xf32, #tpu.memory_space<any>>) target(%arg1 : memref<2x4x16x16xf32, #tpu.memory_space<any>>) target_semaphore(%arg2 : memref<!tpu.dma_semaphore, #tpu.memory_space<semaphore_mem>>)
    tpu.wait_dma2 semaphore(%arg2 : memref<!tpu.dma_semaphore, #tpu.memory_space<semaphore_mem>>) src(%arg0 : memref<2x4x16x16xf32, #tpu.memory_space<any>>) dst(%arg1 : memref<2x4x16x16xf32, #tpu.memory_space<any>>)
    return
  }
}

</mosaic_0001>

<llo_original>
// kernel: tpu_custom_call.1
$region0: #{tpu_custom_call.1}
  #allocation0 [shape = 'u32[]', space=smem, size = 0x4, offset = 0x4, fixed_abs, tag = 'smem constant byte address 0x4 - core index']
  #allocation1 [shape = 'u32[72,128]{1,0:T(1,128)}', space=vmem, size = 0x9000, scoped, tag = 'internal scratch']
  #allocation2 [shape = 's32[1]{0}', space=sflag, size = 0x4, scoped, tag = 'scratch operand']
  #allocation3 [shape = 's32[]', space=sflag, size = 0x4, offset = 0, fixed_abs, tag = 'sflag constant byte address 0x0 - dummy sync flag']
  #allocation4 [shape = 'u32[0]{0}', space=smem, size = 0, offset = 0, fixed_abs, tag = 'smem constant byte address 0x0 - null']
  %s0 = inlined_call_operand.hbm [shape: f32[2,4,16,16], index: 0, kind: input, shape index: {}]
  %s1 = inlined_call_operand.hbm [shape: f32[2,4,16,16], index: 1, kind: output, shape index: {}]
  %s2 = sld [smem:[#allocation0]]
  $region2: #{tpu_custom_call.1} parent=0
    _
  %s4 = ssub.s32 1, %s2
  %s5 = scalar_select 0, %s4, %s2
  %s7 = sshll.u32 1, 14
  %s8 = sxor.u32 4294967295, %s7
  %s10 = sshll.u32 %s0, 4
  %s11 = int_to_ptr.hbm [resolvable:$true] %s10
  %s12 = sshll.u32 %s1, 4
  %s13 = int_to_ptr.hbm [resolvable:$true] %s12
  %16 = dma.general %s11, 2048, %s13, [#allocation2], [#allocation3], [#allocation4], 0, 0
  %s17 = smul.u32 2, 4
  %s18 = smul.u32 %s17, 16
  %s19 = smul.u32 %s18, 1
  %s20 = sshll.u32 %s19, 4
  %21 = dma.done [#allocation2], %s20
  %22 = vsyncmov [#allocation2]
  %s23 = vpop.sfrf %22
  %p24 = scmp.eq.s32.totalorder %s23, 0
  %p25 = pneg %p24
  %27 = shalt.err (%p25)

</llo_original>
